<compile_context>
chip_gen: v6e
topology: v6e:2x2x1
jax: 0.10.0
libtpu: 0.0.40
codegen_flags: <defaults>
</compile_context>

<pallas_src>
import jax
import jax.numpy as jnp
from jax import lax
from jax.experimental import pallas as pl
from jax.experimental.pallas import tpu as pltpu
import numpy as np


def base_receiver_kernel(x_ref, we_ref, be_ref, sig_ref, wl_ref, bl_ref,
                         logp_ref, probs_ref):
    # x_ref:   (B, G, F) bf16  flattened candidates, one row of G per batch
    # we_ref:  (F, E)    bf16  embedder weight, stored (in, out)
    # be_ref:  (1, E)    f32   embedder bias
    # sig_ref: (B, Hs)   f32   signal
    # wl_ref:  (Hs, E)   f32   lin1 weight, stored (in, out)
    # bl_ref:  (1, E)    f32   lin1 bias
    # logp_ref / probs_ref: (B, G) f32

    # --- lin1 for every batch row at once: (B, Hs) @ (Hs, E) + bias ----------
    h = jnp.dot(sig_ref[...], wl_ref[...],
                preferred_element_type=jnp.float32) + bl_ref[...]       # (B, E)

    # --- fused embedder + score ----------------------------------------------
    # score[b,g] = (x[b,g] @ We + be) . h[b] = x[b,g] . (We @ h[b]) + be . h[b]
    # so the (B*G, F) @ (F, E) embedding matmul never needs to happen.
    v = lax.dot_general(h, we_ref[...].astype(jnp.float32),
                        (((1,), (1,)), ((), ())),
                        preferred_element_type=jnp.float32)             # (B, F)
    c = jnp.sum(be_ref[...] * h, axis=-1, keepdims=True)                # (B, 1)

    x3 = x_ref[...].astype(jnp.float32)                                 # (B, G, F)
    s = jnp.sum(x3 * v[:, None, :], axis=-1) + c                        # (B, G)

    # --- softmax / log_softmax over the game dimension (f32 epilogue) --------
    m = jnp.max(s, axis=-1, keepdims=True)
    z = s - m
    p = jnp.exp(z)
    denom = jnp.sum(p, axis=-1, keepdims=True)
    logp_ref[...] = z - jnp.log(denom)
    probs = p * pl.reciprocal(denom, approx=True)
    probs_ref[...] = jnp.round(probs * 100.0) / 100.0   # round(decimals=2)


def base_receiver_forward(signal, data_receiver, w_emb, b_emb, w_lin, b_lin,
                          batch_size, game_size):
    """Returns (log_probs (B, G), receiver_probs (B, G))."""
    B, G = batch_size, game_size
    F, E = w_emb.shape
    Hs = w_lin.shape[0]

    # Glue: flatten NCHW candidates -> (B, G, F).  bf16 storage for the two
    # large operands halves their HBM->VMEM bytes; compute stays f32 in-kernel.
    x = data_receiver.reshape(B, G, F).astype(jnp.bfloat16)
    we = w_emb.astype(jnp.bfloat16)
    be = b_emb.reshape(1, E).astype(jnp.float32)
    sig = signal.reshape(B, Hs).astype(jnp.float32)
    wl = w_lin.astype(jnp.float32)
    bl = b_lin.reshape(1, E).astype(jnp.float32)

    vmem = lambda: pl.BlockSpec(memory_space=pltpu.MemorySpace.VMEM)
    logp, probs = pl.pallas_call(
        base_receiver_kernel,
        out_shape=(jax.ShapeDtypeStruct((B, G), jnp.float32),
                   jax.ShapeDtypeStruct((B, G), jnp.float32)),
        in_specs=[vmem() for _ in range(6)],
        out_specs=(vmem(), vmem()),
    )(x, we, be, sig, wl, bl)
    return logp, probs


def reference_forward_np(signal, x_flat, w_emb, b_emb, w_lin, b_lin, B, G):
    """Direct (non-fused) float32 NumPy reference of the module forward."""
    emb = x_flat @ w_emb + b_emb                       # (B*G, E)
    emb = emb.reshape(B, G, -1)
    h = signal @ w_lin + b_lin                         # (B, E)
    out = np.einsum("bge,be->bg", emb, h)              # (B, G)
    out = out - out.max(axis=1, keepdims=True)
    e = np.exp(out)
    denom = e.sum(axis=1, keepdims=True)
    logp = out - np.log(denom)
    probs = e / denom                                  # unrounded
    return logp.astype(np.float32), probs.astype(np.float32)


if __name__ == "__main__":
    # Options (small, consistent with the module's forward)
    batch_size = 2
    game_size = 4
    hidden_size = 32       # options.hidden_size  (signal dim)
    embedding_size = 32    # options.embedding_size
    C, H, W = 4, 16, 16
    feat_dim = C * H * W   # 1024

    key = jax.random.PRNGKey(0)
    k1, k2, k3, k4, k5, k6 = jax.random.split(key, 6)

    # deterministic "parameters" (Linear-style uniform init)
    lim_e = 1.0 / np.sqrt(feat_dim)
    lim_l = 1.0 / np.sqrt(hidden_size)
    w_emb = jax.random.uniform(k1, (feat_dim, embedding_size),
                               minval=-lim_e, maxval=lim_e, dtype=jnp.float32)
    b_emb = jax.random.uniform(k2, (embedding_size,),
                               minval=-lim_e, maxval=lim_e, dtype=jnp.float32)
    w_lin = jax.random.uniform(k3, (hidden_size, embedding_size),
                               minval=-lim_l, maxval=lim_l, dtype=jnp.float32)
    b_lin = jax.random.uniform(k4, (embedding_size,),
                               minval=-lim_l, maxval=lim_l, dtype=jnp.float32)

    # inputs: signal (B, hidden), data_receiver (B*G, C, H, W) in NCHW
    signal = jax.random.normal(k5, (batch_size, hidden_size), dtype=jnp.float32)
    data_receiver = jax.random.normal(
        k6, (batch_size * game_size, C, H, W), dtype=jnp.float32)

    log_probs, receiver_probs = base_receiver_forward(
        signal, data_receiver, w_emb, b_emb, w_lin, b_lin,
        batch_size, game_size)
    log_probs = np.asarray(jax.block_until_ready(log_probs))
    receiver_probs = np.asarray(jax.block_until_ready(receiver_probs))

    # Reference uses the SAME bf16-quantized x / w_emb values the kernel sees
    # (bf16 storage is a deliberate optimization); everything else is f32.
    x_vals = np.asarray(
        data_receiver.reshape(batch_size * game_size, feat_dim)
        .astype(jnp.bfloat16).astype(jnp.float32))
    w_emb_vals = np.asarray(w_emb.astype(jnp.bfloat16).astype(jnp.float32))

    ref_logp, ref_probs = reference_forward_np(
        np.asarray(signal), x_vals, w_emb_vals,
        np.asarray(b_emb), np.asarray(w_lin), np.asarray(b_lin),
        batch_size, game_size)

    # Internal consistency: extracted log-probs form a proper distribution.
    np.testing.assert_allclose(np.exp(log_probs).sum(axis=1), 1.0, atol=1e-4)
    # Vs. reference (tolerance covers bf16 storage, MXU pass differences and
    # the 2-decimal rounding of receiver_probs).
    np.testing.assert_allclose(log_probs, ref_logp, rtol=0.0, atol=4e-2)
    np.testing.assert_allclose(receiver_probs, ref_probs, rtol=0.0, atol=1.5e-2)

    print("KERNEL_OK")
</pallas_src>

<mosaic_0001>
module attributes {stable_mosaic.version = 11 : i64} {
  func.func @base_receiver_kernel(%arg0: memref<2x4x1024xbf16, #tpu.memory_space<vmem>>, %arg1: memref<1024x32xbf16, #tpu.memory_space<vmem>>, %arg2: memref<1x32xf32, #tpu.memory_space<vmem>>, %arg3: memref<2x32xf32, #tpu.memory_space<vmem>>, %arg4: memref<32x32xf32, #tpu.memory_space<vmem>>, %arg5: memref<1x32xf32, #tpu.memory_space<vmem>>, %arg6: memref<2x4xf32, #tpu.memory_space<vmem>>, %arg7: memref<2x4xf32, #tpu.memory_space<vmem>>) attributes {dimension_semantics = [], scalar_prefetch = 0 : i64, scratch_operands = 0 : i64, tpu.core_type = #tpu.core_type<tc>} {
    %c0 = arith.constant 0 : index
    %c0_0 = arith.constant 0 : index
    %0 = vector.load %arg3[%c0, %c0_0] : memref<2x32xf32, #tpu.memory_space<vmem>>, vector<2x32xf32>
    %c0_1 = arith.constant 0 : index
    %c0_2 = arith.constant 0 : index
    %1 = vector.load %arg4[%c0_1, %c0_2] : memref<32x32xf32, #tpu.memory_space<vmem>>, vector<32x32xf32>
    %cst = arith.constant dense<0.000000e+00> : vector<2x32xf32>
    %2 = tpu.matmul %0, %1, %cst {dimension_numbers = #tpu.dot_dimension_numbers<[1], [0], [0], [1], [0, 0, 1, 1], [], []>} : vector<2x32xf32>, vector<32x32xf32>, vector<2x32xf32> -> vector<2x32xf32>
    %c0_3 = arith.constant 0 : index
    %c0_4 = arith.constant 0 : index
    %3 = vector.load %arg5[%c0_3, %c0_4] : memref<1x32xf32, #tpu.memory_space<vmem>>, vector<1x32xf32>
    %4 = vector.broadcast %3 : vector<1x32xf32> to vector<2x32xf32>
    %5 = arith.addf %2, %4 : vector<2x32xf32>
    %c0_5 = arith.constant 0 : index
    %c0_6 = arith.constant 0 : index
    %6 = vector.load %arg1[%c0_5, %c0_6] : memref<1024x32xbf16, #tpu.memory_space<vmem>>, vector<1024x32xbf16>
    %7 = arith.extf %6 : vector<1024x32xbf16> to vector<1024x32xf32>
    %cst_7 = arith.constant dense<0.000000e+00> : vector<2x1024xf32>
    %8 = tpu.matmul %5, %7, %cst_7 {dimension_numbers = #tpu.dot_dimension_numbers<[1], [1], [0], [0], [0, 0, 1, 0], [], []>} : vector<2x32xf32>, vector<1024x32xf32>, vector<2x1024xf32> -> vector<2x1024xf32>
    %c0_8 = arith.constant 0 : index
    %c0_9 = arith.constant 0 : index
    %9 = vector.load %arg2[%c0_8, %c0_9] : memref<1x32xf32, #tpu.memory_space<vmem>>, vector<1x32xf32>
    %10 = vector.broadcast %9 : vector<1x32xf32> to vector<2x32xf32>
    %11 = arith.mulf %10, %5 : vector<2x32xf32>
    %cst_10 = arith.constant dense<0.000000e+00> : vector<2xf32>
    %12 = vector.multi_reduction <add>, %11, %cst_10 [1] : vector<2x32xf32> to vector<2xf32>
    %13 = vector.shape_cast %12 : vector<2xf32> to vector<2x1xf32>
    %c0_11 = arith.constant 0 : index
    %c0_12 = arith.constant 0 : index
    %c0_13 = arith.constant 0 : index
    %14 = vector.load %arg0[%c0_11, %c0_12, %c0_13] : memref<2x4x1024xbf16, #tpu.memory_space<vmem>>, vector<2x4x1024xbf16>
    %15 = arith.extf %14 : vector<2x4x1024xbf16> to vector<2x4x1024xf32>
    %16 = vector.shape_cast %8 : vector<2x1024xf32> to vector<2x1x1024xf32>
    %17 = vector.broadcast %16 : vector<2x1x1024xf32> to vector<2x4x1024xf32>
    %18 = arith.mulf %15, %17 : vector<2x4x1024xf32>
    %cst_14 = arith.constant dense<0.000000e+00> : vector<2x4xf32>
    %19 = vector.multi_reduction <add>, %18, %cst_14 [2] : vector<2x4x1024xf32> to vector<2x4xf32>
    %20 = vector.broadcast %13 : vector<2x1xf32> to vector<2x4xf32>
    %21 = arith.addf %19, %20 : vector<2x4xf32>
    %cst_15 = arith.constant dense<0xFF800000> : vector<2xf32>
    %22 = vector.multi_reduction <maximumf>, %21, %cst_15 [1] : vector<2x4xf32> to vector<2xf32>
    %23 = vector.shape_cast %22 : vector<2xf32> to vector<2x1xf32>
    %24 = vector.broadcast %23 : vector<2x1xf32> to vector<2x4xf32>
    %25 = arith.subf %21, %24 : vector<2x4xf32>
    %26 = math.exp %25 : vector<2x4xf32>
    %cst_16 = arith.constant dense<0.000000e+00> : vector<2xf32>
    %27 = vector.multi_reduction <add>, %26, %cst_16 [1] : vector<2x4xf32> to vector<2xf32>
    %28 = vector.shape_cast %27 : vector<2xf32> to vector<2x1xf32>
    %29 = math.log %28 : vector<2x1xf32>
    %30 = vector.broadcast %29 : vector<2x1xf32> to vector<2x4xf32>
    %31 = arith.subf %25, %30 : vector<2x4xf32>
    %c0_17 = arith.constant 0 : index
    %c0_18 = arith.constant 0 : index
    %32 = vector.load %arg6[%c0_17, %c0_18] : memref<2x4xf32, #tpu.memory_space<vmem>>, vector<2x4xf32>
    tpu.vector_store %arg6[%c0_17, %c0_18], %31 {strides = array<i32>} : memref<2x4xf32, #tpu.memory_space<vmem>>, vector<2x4xf32>,
    %33 = tpu.reciprocal %28 {approx = true} : vector<2x1xf32> -> vector<2x1xf32>
    %34 = vector.broadcast %33 : vector<2x1xf32> to vector<2x4xf32>
    %35 = arith.mulf %26, %34 : vector<2x4xf32>
    %cst_19 = arith.constant 1.000000e+02 : f32
    %36 = vector.broadcast %cst_19 : f32 to vector<2x4xf32>
    %37 = arith.mulf %35, %36 : vector<2x4xf32>
    %38 = math.roundeven %37 : vector<2x4xf32>
    %cst_20 = arith.constant 1.000000e+02 : f32
    %39 = vector.broadcast %cst_20 : f32 to vector<2x4xf32>
    %40 = arith.divf %38, %39 : vector<2x4xf32>
    %c0_21 = arith.constant 0 : index
    %c0_22 = arith.constant 0 : index
    %41 = vector.load %arg7[%c0_21, %c0_22] : memref<2x4xf32, #tpu.memory_space<vmem>>, vector<2x4xf32>
    tpu.vector_store %arg7[%c0_21, %c0_22], %40 {strides = array<i32>} : memref<2x4xf32, #tpu.memory_space<vmem>>, vector<2x4xf32>,
    return
  }
}

</mosaic_0001>

<llo_original>
// kernel: tpu_custom_call.1
$region0: #{tpu_custom_call.1}
  #allocation0 [shape = 'u32[]', space=smem, size = 0x4, offset = 0x4, fixed_abs, tag = 'smem constant byte address 0x4 - core index']
  #allocation1 [shape = 'u32[144,128]{1,0:T(1,128)}', space=vmem, size = 0x12000, scoped, tag = 'internal scratch']
  %s0 = inlined_call_operand.vmem [shape: bf16[2,4,1024], index: 0, kind: input, shape index: {}]
  %s1 = inlined_call_operand.vmem [shape: bf16[1024,32], index: 1, kind: input, shape index: {}]
  %s2 = inlined_call_operand.vmem [shape: f32[1,32], index: 2, kind: input, shape index: {}]
  %s3 = inlined_call_operand.vmem [shape: f32[2,32], index: 3, kind: input, shape index: {}]
  %s4 = inlined_call_operand.vmem [shape: f32[32,32], index: 4, kind: input, shape index: {}]
  %s5 = inlined_call_operand.vmem [shape: f32[1,32], index: 5, kind: input, shape index: {}]
  %s6 = inlined_call_operand.hbm [shape: f32[2,4], index: 6, kind: output, shape index: {0}]
  %s7 = inlined_call_operand.hbm [shape: f32[2,4], index: 7, kind: output, shape index: {1}]
  %8 = xla_tuple %s6, %s7
  %s9 = sld [smem:[#allocation0]]
  $region42: #{tpu_custom_call.1} parent=0
    _
  %s11 = ssub.s32 1, %s9
  %s12 = scalar_select 0, %s11, %s9
  $region1: #{tpu_custom_call.1} parent=0
    #allocation2 [shape = 'u8[1024]{0}', space=vmem, size = 0x400, scoped, tag = 'output window, operand 0, single buffered']
    #allocation3 [shape = 's32[1]{0}', space=sflag, size = 0x4, scoped, tag = 'scoped memory for tpu_custom_call.1']
    #allocation4 [shape = 'u8[1024]{0}', space=vmem, size = 0x400, scoped, tag = 'output window, operand 1, single buffered']
    #allocation5 [shape = 's32[1]{0}', space=sflag, size = 0x4, scoped, tag = 'scoped memory for tpu_custom_call.1']
    %13 = vsyncpa [#allocation3], 0
    %14 = vsyncpa [#allocation5], 0
    // Predicated region
    $region2: #{tpu_custom_call.1} parent=1 // pred_check
      _
    $region3: #{tpu_custom_call.1} parent=1 // pred_check_branch
      %16 = sbr.rel (0) target = $region5
    $region4: #{tpu_custom_call.1} parent=1 // pred_region
      _
    $region5: #{tpu_custom_call.1} parent=1 // pred_fallthru
      _
    // Predicated region
    $region6: #{tpu_custom_call.1} parent=1 // pred_check
      _
    $region7: #{tpu_custom_call.1} parent=1 // pred_check_branch
      %18 = sbr.rel (0) target = $region9
    $region8: #{tpu_custom_call.1} parent=1 // pred_region
      _
    $region9: #{tpu_custom_call.1} parent=1 // pred_fallthru
      _
    // Predicated region
    $region10: #{tpu_custom_call.1} parent=1 // pred_check
      _
    $region11: #{tpu_custom_call.1} parent=1 // pred_check_branch
      %20 = sbr.rel (0) target = $region13
    $region12: #{tpu_custom_call.1} parent=1 // pred_region
      _
    $region13: #{tpu_custom_call.1} parent=1 // pred_fallthru
      _
    // Predicated region
    $region14: #{tpu_custom_call.1} parent=1 // pred_check
      _
    $region15: #{tpu_custom_call.1} parent=1 // pred_check_branch
      %22 = sbr.rel (0) target = $region17
    $region16: #{tpu_custom_call.1} parent=1 // pred_region
      _
    $region17: #{tpu_custom_call.1} parent=1 // pred_fallthru
      _
    // Predicated region
    $region18: #{tpu_custom_call.1} parent=1 // pred_check
      _
    $region19: #{tpu_custom_call.1} parent=1 // pred_check_branch
      %24 = sbr.rel (0) target = $region21
    $region20: #{tpu_custom_call.1} parent=1 // pred_region
      _
    $region21: #{tpu_custom_call.1} parent=1 // pred_fallthru
      _
    // Predicated region
    $region22: #{tpu_custom_call.1} parent=1 // pred_check
      _
    $region23: #{tpu_custom_call.1} parent=1 // pred_check_branch
      %26 = sbr.rel (0) target = $region25
    $region24: #{tpu_custom_call.1} parent=1 // pred_region
      _
    $region25: #{tpu_custom_call.1} parent=1 // pred_fallthru
      _
    %v27 = vld [vmem:[%s3] sm:$0x3]
    %v28 = vld [vmem:[%s4] sm:$0xff]
    %v29 = vld [vmem:[%s4 + $0x8] sm:$0xff]
    %v30 = vld [vmem:[%s4 + $0x10] sm:$0xff]
    %v31 = vld [vmem:[%s4 + $0x18] sm:$0xff]
    %v32 = vld [vmem:[%s5] sm:$0x1]
    %v34 = vlaneseq
    %v35 = vshrl.u32 %v34, 7
    %v36 = vsub.s32 0, %v35
    %v37 = vrot.slane %v32, %v36
    %vm39 = vcmask 261120
    %v41 = vsel %vm39, %v27, 0
    %43 = vmatprep.subr.mxu0 0.0
    %44 = vmatpush1.msra.mxu0 0.0
    %45 = vmatprep.subr.mxu0 0.0
    %46 = vmatpush1.msra.mxu0 0.0
    %47 = vmatprep.subr.mxu0 0.0
    %48 = vmatpush1.msra.mxu0 0.0
    %49 = vmatprep.subr.mxu0 0.0
    %50 = vmatpush1.msra.mxu0 0.0
    %51 = vmatprep.subr.mxu0 0.0
    %52 = vmatpush1.msra.mxu0 0.0
    %53 = vmatprep.subr.mxu0 0.0
    %54 = vmatpush1.msra.mxu0 0.0
    %55 = vmatprep.subr.mxu0 0.0
    %56 = vmatpush1.msra.mxu0 0.0
    %57 = vmatprep.subr.mxu0 0.0
    %58 = vmatpush1.msra.mxu0 0.0
    %59 = vmatprep.subr.mxu0 0.0
    %60 = vmatpush1.msra.mxu0 0.0
    %61 = vmatprep.subr.mxu0 0.0
    %62 = vmatpush1.msra.mxu0 0.0
    %63 = vmatprep.subr.mxu0 0.0
    %64 = vmatpush1.msra.mxu0 0.0
    %65 = vmatprep.subr.mxu0 0.0
    %66 = vmatpush1.msra.mxu0 0.0
    %67 = vmatprep.subr.mxu0 0.0
    %68 = vmatpush1.msra.mxu0 %v31
    %69 = vmatprep.subr.mxu0 0.0
    %70 = vmatpush1.msra.mxu0 %v30
    %71 = vmatprep.subr.mxu0 0.0
    %72 = vmatpush1.msra.mxu0 %v29
    %73 = vmatprep.subr.mxu0 0.0
    %74 = vmatpush1.msra.mxu0 %v28
    %75 = vmatprep.subr.mxu0 0.0
    %76 = vmatpush2.msra.mxu0 0.0
    %77 = vmatprep.subr.mxu0 0.0
    %78 = vmatpush2.msra.mxu0 0.0
    %79 = vmatprep.subr.mxu0 0.0
    %80 = vmatpush2.msra.mxu0 0.0
    %81 = vmatprep.subr.mxu0 0.0
    %82 = vmatpush2.msra.mxu0 0.0
    %83 = vmatprep.subr.mxu0 0.0
    %84 = vmatpush2.msra.mxu0 0.0
    %85 = vmatprep.subr.mxu0 0.0
    %86 = vmatpush2.msra.mxu0 0.0
    %87 = vmatprep.subr.mxu0 0.0
    %88 = vmatpush2.msra.mxu0 0.0
    %89 = vmatprep.subr.mxu0 0.0
    %90 = vmatpush2.msra.mxu0 0.0
    %91 = vmatprep.subr.mxu0 0.0
    %92 = vmatpush2.msra.mxu0 0.0
    %93 = vmatprep.subr.mxu0 0.0
    %94 = vmatpush2.msra.mxu0 0.0
    %95 = vmatprep.subr.mxu0 0.0
    %96 = vmatpush2.msra.mxu0 0.0
    %97 = vmatprep.subr.mxu0 0.0
    %98 = vmatpush2.msra.mxu0 0.0
    %99 = vmatprep.subr.mxu0 0.0
    %100 = vmatpush2.msra.mxu0 0.0
    %101 = vmatprep.subr.mxu0 0.0
    %102 = vmatpush2.msra.mxu0 0.0
    %103 = vmatprep.subr.mxu0 0.0
    %104 = vmatpush2.msra.mxu0 0.0
    %105 = vmatprep.subr.mxu0 0.0
    %106 = vmatpush2.msra.mxu0 0.0
    %107 = vmatprep.mubr.f32.mxu0 0.0
    %108 = vmatmul.mubr.f32.gmra.mxu0 %v41
    %v109 = vpop.f32.mrf.mxu0
    %v110 = vadd.f32 %v37, %v109
    %v111 = vpop.f32.mrf.mxu0
    %112 = vdwg.mxu0
    %v113 = vld [vmem:[%s1] sm:$0xf]
    %v114 = vld [vmem:[%s1 + $0x4] sm:$0xf]
    %v115 = vld [vmem:[%s1 + $0x8] sm:$0xf]
    %v116 = vld [vmem:[%s1 + $0xc] sm:$0xf]
    %v117 = vld [vmem:[%s1 + $0x10] sm:$0xf]
    %v118 = vld [vmem:[%s1 + $0x14] sm:$0xf]
    %v119 = vld [vmem:[%s1 + $0x18] sm:$0xf]
    %v120 = vld [vmem:[%s1 + $0x1c] sm:$0xf]
    %v121 = vld [vmem:[%s1 + $0x20] sm:$0xf]
    %v122 = vld [vmem:[%s1 + $0x24] sm:$0xf]
    %v123 = vld [vmem:[%s1 + $0x28] sm:$0xf]
    %v124 = vld [vmem:[%s1 + $0x2c] sm:$0xf]
    %v125 = vld [vmem:[%s1 + $0x30] sm:$0xf]
    %v126 = vld [vmem:[%s1 + $0x34] sm:$0xf]
    %v127 = vld [vmem:[%s1 + $0x38] sm:$0xf]
    %v128 = vld [vmem:[%s1 + $0x3c] sm:$0xf]
    %v129 = vld [vmem:[%s1 + $0x40] sm:$0xf]
    %v130 = vld [vmem:[%s1 + $0x44] sm:$0xf]
    %v131 = vld [vmem:[%s1 + $0x48] sm:$0xf]
    %v132 = vld [vmem:[%s1 + $0x4c] sm:$0xf]
    %v133 = vld [vmem:[%s1 + $0x50] sm:$0xf]
    %v134 = vld [vmem:[%s1 + $0x54] sm:$0xf]
    %v135 = vld [vmem:[%s1 + $0x58] sm:$0xf]
    %v136 = vld [vmem:[%s1 + $0x5c] sm:$0xf]
    %v137 = vld [vmem:[%s1 + $0x60] sm:$0xf]
    %v138 = vld [vmem:[%s1 + $0x64] sm:$0xf]
    %v139 = vld [vmem:[%s1 + $0x68] sm:$0xf]
    %v140 = vld [vmem:[%s1 + $0x6c] sm:$0xf]
    %v141 = vld [vmem:[%s1 + $0x70] sm:$0xf]
    %v142 = vld [vmem:[%s1 + $0x74] sm:$0xf]
    %v143 = vld [vmem:[%s1 + $0x78] sm:$0xf]
    %v144 = vld [vmem:[%s1 + $0x7c] sm:$0xf]
    %v145 = vld [vmem:[%s1 + $0x80] sm:$0xf]
    %v146 = vld [vmem:[%s1 + $0x84] sm:$0xf]
    %v147 = vld [vmem:[%s1 + $0x88] sm:$0xf]
    %v148 = vld [vmem:[%s1 + $0x8c] sm:$0xf]
    %v149 = vld [vmem:[%s1 + $0x90] sm:$0xf]
    %v150 = vld [vmem:[%s1 + $0x94] sm:$0xf]
    %v151 = vld [vmem:[%s1 + $0x98] sm:$0xf]
    %v152 = vld [vmem:[%s1 + $0x9c] sm:$0xf]
    %v153 = vld [vmem:[%s1 + $0xa0] sm:$0xf]
    %v154 = vld [vmem:[%s1 + $0xa4] sm:$0xf]
    %v155 = vld [vmem:[%s1 + $0xa8] sm:$0xf]
    %v156 = vld [vmem:[%s1 + $0xac] sm:$0xf]
    %v157 = vld [vmem:[%s1 + $0xb0] sm:$0xf]
    %v158 = vld [vmem:[%s1 + $0xb4] sm:$0xf]
    %v159 = vld [vmem:[%s1 + $0xb8] sm:$0xf]
    %v160 = vld [vmem:[%s1 + $0xbc] sm:$0xf]
    %v161 = vld [vmem:[%s1 + $0xc0] sm:$0xf]
    %v162 = vld [vmem:[%s1 + $0xc4] sm:$0xf]
    %v163 = vld [vmem:[%s1 + $0xc8] sm:$0xf]
    %v164 = vld [vmem:[%s1 + $0xcc] sm:$0xf]
    %v165 = vld [vmem:[%s1 + $0xd0] sm:$0xf]
    %v166 = vld [vmem:[%s1 + $0xd4] sm:$0xf]
    %v167 = vld [vmem:[%s1 + $0xd8] sm:$0xf]
    %v168 = vld [vmem:[%s1 + $0xdc] sm:$0xf]
    %v169 = vld [vmem:[%s1 + $0xe0] sm:$0xf]
    %v170 = vld [vmem:[%s1 + $0xe4] sm:$0xf]
    %v171 = vld [vmem:[%s1 + $0xe8] sm:$0xf]
    %v172 = vld [vmem:[%s1 + $0xec] sm:$0xf]
    %v173 = vld [vmem:[%s1 + $0xf0] sm:$0xf]
    %v174 = vld [vmem:[%s1 + $0xf4] sm:$0xf]
    %v175 = vld [vmem:[%s1 + $0xf8] sm:$0xf]
    %v176 = vld [vmem:[%s1 + $0xfc] sm:$0xf]
    %v177 = vld [vmem:[%s1 + $0x100] sm:$0xf]
    %v178 = vld [vmem:[%s1 + $0x104] sm:$0xf]
    %v179 = vld [vmem:[%s1 + $0x108] sm:$0xf]
    %v180 = vld [vmem:[%s1 + $0x10c] sm:$0xf]
    %v181 = vld [vmem:[%s1 + $0x110] sm:$0xf]
    %v182 = vld [vmem:[%s1 + $0x114] sm:$0xf]
    %v183 = vld [vmem:[%s1 + $0x118] sm:$0xf]
    %v184 = vld [vmem:[%s1 + $0x11c] sm:$0xf]
    %v185 = vld [vmem:[%s1 + $0x120] sm:$0xf]
    %v186 = vld [vmem:[%s1 + $0x124] sm:$0xf]
    %v187 = vld [vmem:[%s1 + $0x128] sm:$0xf]
    %v188 = vld [vmem:[%s1 + $0x12c] sm:$0xf]
    %v189 = vld [vmem:[%s1 + $0x130] sm:$0xf]
    %v190 = vld [vmem:[%s1 + $0x134] sm:$0xf]
    %v191 = vld [vmem:[%s1 + $0x138] sm:$0xf]
    %v192 = vld [vmem:[%s1 + $0x13c] sm:$0xf]
    %v193 = vld [vmem:[%s1 + $0x140] sm:$0xf]
    %v194 = vld [vmem:[%s1 + $0x144] sm:$0xf]
    %v195 = vld [vmem:[%s1 + $0x148] sm:$0xf]
    %v196 = vld [vmem:[%s1 + $0x14c] sm:$0xf]
    %v197 = vld [vmem:[%s1 + $0x150] sm:$0xf]
    %v198 = vld [vmem:[%s1 + $0x154] sm:$0xf]
    %v199 = vld [vmem:[%s1 + $0x158] sm:$0xf]
    %v200 = vld [vmem:[%s1 + $0x15c] sm:$0xf]
    %v201 = vld [vmem:[%s1 + $0x160] sm:$0xf]
    %v202 = vld [vmem:[%s1 + $0x164] sm:$0xf]
    %v203 = vld [vmem:[%s1 + $0x168] sm:$0xf]
    %v204 = vld [vmem:[%s1 + $0x16c] sm:$0xf]
    %v205 = vld [vmem:[%s1 + $0x170] sm:$0xf]
    %v206 = vld [vmem:[%s1 + $0x174] sm:$0xf]
    %v207 = vld [vmem:[%s1 + $0x178] sm:$0xf]
    %v208 = vld [vmem:[%s1 + $0x17c] sm:$0xf]
    %v209 = vld [vmem:[%s1 + $0x180] sm:$0xf]
    %v210 = vld [vmem:[%s1 + $0x184] sm:$0xf]
    %v211 = vld [vmem:[%s1 + $0x188] sm:$0xf]
    %v212 = vld [vmem:[%s1 + $0x18c] sm:$0xf]
    %v213 = vld [vmem:[%s1 + $0x190] sm:$0xf]
    %v214 = vld [vmem:[%s1 + $0x194] sm:$0xf]
    %v215 = vld [vmem:[%s1 + $0x198] sm:$0xf]
    %v216 = vld [vmem:[%s1 + $0x19c] sm:$0xf]
    %v217 = vld [vmem:[%s1 + $0x1a0] sm:$0xf]
    %v218 = vld [vmem:[%s1 + $0x1a4] sm:$0xf]
    %v219 = vld [vmem:[%s1 + $0x1a8] sm:$0xf]
    %v220 = vld [vmem:[%s1 + $0x1ac] sm:$0xf]
    %v221 = vld [vmem:[%s1 + $0x1b0] sm:$0xf]
    %v222 = vld [vmem:[%s1 + $0x1b4] sm:$0xf]
    %v223 = vld [vmem:[%s1 + $0x1b8] sm:$0xf]
    %v224 = vld [vmem:[%s1 + $0x1bc] sm:$0xf]
    %v225 = vld [vmem:[%s1 + $0x1c0] sm:$0xf]
    %v226 = vld [vmem:[%s1 + $0x1c4] sm:$0xf]
    %v227 = vld [vmem:[%s1 + $0x1c8] sm:$0xf]
    %v228 = vld [vmem:[%s1 + $0x1cc] sm:$0xf]
    %v229 = vld [vmem:[%s1 + $0x1d0] sm:$0xf]
    %v230 = vld [vmem:[%s1 + $0x1d4] sm:$0xf]
    %v231 = vld [vmem:[%s1 + $0x1d8] sm:$0xf]
    %v232 = vld [vmem:[%s1 + $0x1dc] sm:$0xf]
    %v233 = vld [vmem:[%s1 + $0x1e0] sm:$0xf]
    %v234 = vld [vmem:[%s1 + $0x1e4] sm:$0xf]
    %v235 = vld [vmem:[%s1 + $0x1e8] sm:$0xf]
    %v236 = vld [vmem:[%s1 + $0x1ec] sm:$0xf]
    %v237 = vld [vmem:[%s1 + $0x1f0] sm:$0xf]
    %v238 = vld [vmem:[%s1 + $0x1f4] sm:$0xf]
    %v239 = vld [vmem:[%s1 + $0x1f8] sm:$0xf]
    %v240 = vld [vmem:[%s1 + $0x1fc] sm:$0xf]
    %v241 = vunpack.c.l.bf16 %v113
    %v242 = vunpack.c.l.bf16 %v114
    %v243 = vunpack.c.l.bf16 %v115
    %v244 = vunpack.c.l.bf16 %v116
    %v245 = vunpack.c.l.bf16 %v117
    %v246 = vunpack.c.l.bf16 %v118
    %v247 = vunpack.c.l.bf16 %v119
    %v248 = vunpack.c.l.bf16 %v120
    %v249 = vunpack.c.l.bf16 %v121
    %v250 = vunpack.c.l.bf16 %v122
    %v251 = vunpack.c.l.bf16 %v123
    %v252 = vunpack.c.l.bf16 %v124
    %v253 = vunpack.c.l.bf16 %v125
    %v254 = vunpack.c.l.bf16 %v126
    %v255 = vunpack.c.l.bf16 %v127
    %v256 = vunpack.c.l.bf16 %v128
    %v257 = vunpack.c.l.bf16 %v129
    %v258 = vunpack.c.l.bf16 %v130
    %v259 = vunpack.c.l.bf16 %v131
    %v260 = vunpack.c.l.bf16 %v132
    %v261 = vunpack.c.l.bf16 %v133
    %v262 = vunpack.c.l.bf16 %v134
    %v263 = vunpack.c.l.bf16 %v135
    %v264 = vunpack.c.l.bf16 %v136
    %v265 = vunpack.c.l.bf16 %v137
    %v266 = vunpack.c.l.bf16 %v138
    %v267 = vunpack.c.l.bf16 %v139
    %v268 = vunpack.c.l.bf16 %v140
    %v269 = vunpack.c.l.bf16 %v141
    %v270 = vunpack.c.l.bf16 %v142
    %v271 = vunpack.c.l.bf16 %v143
    %v272 = vunpack.c.l.bf16 %v144
    %v273 = vunpack.c.l.bf16 %v145
    %v274 = vunpack.c.l.bf16 %v146
    %v275 = vunpack.c.l.bf16 %v147
    %v276 = vunpack.c.l.bf16 %v148
    %v277 = vunpack.c.l.bf16 %v149
    %v278 = vunpack.c.l.bf16 %v150
    %v279 = vunpack.c.l.bf16 %v151
    %v280 = vunpack.c.l.bf16 %v152
    %v281 = vunpack.c.l.bf16 %v153
    %v282 = vunpack.c.l.bf16 %v154
    %v283 = vunpack.c.l.bf16 %v155
    %v284 = vunpack.c.l.bf16 %v156
    %v285 = vunpack.c.l.bf16 %v157
    %v286 = vunpack.c.l.bf16 %v158
    %v287 = vunpack.c.l.bf16 %v159
    %v288 = vunpack.c.l.bf16 %v160
    %v289 = vunpack.c.l.bf16 %v161
    %v290 = vunpack.c.l.bf16 %v162
    %v291 = vunpack.c.l.bf16 %v163
    %v292 = vunpack.c.l.bf16 %v164
    %v293 = vunpack.c.l.bf16 %v165
    %v294 = vunpack.c.l.bf16 %v166
    %v295 = vunpack.c.l.bf16 %v167
    %v296 = vunpack.c.l.bf16 %v168
    %v297 = vunpack.c.l.bf16 %v169
    %v298 = vunpack.c.l.bf16 %v170
    %v299 = vunpack.c.l.bf16 %v171
    %v300 = vunpack.c.l.bf16 %v172
    %v301 = vunpack.c.l.bf16 %v173
    %v302 = vunpack.c.l.bf16 %v174
    %v303 = vunpack.c.l.bf16 %v175
    %v304 = vunpack.c.l.bf16 %v176
    %v305 = vunpack.c.l.bf16 %v177
    %v306 = vunpack.c.l.bf16 %v178
    %v307 = vunpack.c.l.bf16 %v179
    %v308 = vunpack.c.l.bf16 %v180
    %v309 = vunpack.c.l.bf16 %v181
    %v310 = vunpack.c.l.bf16 %v182
    %v311 = vunpack.c.l.bf16 %v183
    %v312 = vunpack.c.l.bf16 %v184
    %v313 = vunpack.c.l.bf16 %v185
    %v314 = vunpack.c.l.bf16 %v186
    %v315 = vunpack.c.l.bf16 %v187
    %v316 = vunpack.c.l.bf16 %v188
    %v317 = vunpack.c.l.bf16 %v189
    %v318 = vunpack.c.l.bf16 %v190
    %v319 = vunpack.c.l.bf16 %v191
    %v320 = vunpack.c.l.bf16 %v192
    %v321 = vunpack.c.l.bf16 %v193
    %v322 = vunpack.c.l.bf16 %v194
    %v323 = vunpack.c.l.bf16 %v195
    %v324 = vunpack.c.l.bf16 %v196
    %v325 = vunpack.c.l.bf16 %v197
    %v326 = vunpack.c.l.bf16 %v198
    %v327 = vunpack.c.l.bf16 %v199
    %v328 = vunpack.c.l.bf16 %v200
    %v329 = vunpack.c.l.bf16 %v201
    %v330 = vunpack.c.l.bf16 %v202
    %v331 = vunpack.c.l.bf16 %v203
    %v332 = vunpack.c.l.bf16 %v204
    %v333 = vunpack.c.l.bf16 %v205
    %v334 = vunpack.c.l.bf16 %v206
    %v335 = vunpack.c.l.bf16 %v207
    %v336 = vunpack.c.l.bf16 %v208
    %v337 = vunpack.c.l.bf16 %v209
    %v338 = vunpack.c.l.bf16 %v210
    %v339 = vunpack.c.l.bf16 %v211
    %v340 = vunpack.c.l.bf16 %v212
    %v341 = vunpack.c.l.bf16 %v213
    %v342 = vunpack.c.l.bf16 %v214
    %v343 = vunpack.c.l.bf16 %v215
    %v344 = vunpack.c.l.bf16 %v216
    %v345 = vunpack.c.l.bf16 %v217
    %v346 = vunpack.c.l.bf16 %v218
    %v347 = vunpack.c.l.bf16 %v219
    %v348 = vunpack.c.l.bf16 %v220
    %v349 = vunpack.c.l.bf16 %v221
    %v350 = vunpack.c.l.bf16 %v222
    %v351 = vunpack.c.l.bf16 %v223
    %v352 = vunpack.c.l.bf16 %v224
    %v353 = vunpack.c.l.bf16 %v225
    %v354 = vunpack.c.l.bf16 %v226
    %v355 = vunpack.c.l.bf16 %v227
    %v356 = vunpack.c.l.bf16 %v228
    %v357 = vunpack.c.l.bf16 %v229
    %v358 = vunpack.c.l.bf16 %v230
    %v359 = vunpack.c.l.bf16 %v231
    %v360 = vunpack.c.l.bf16 %v232
    %v361 = vunpack.c.l.bf16 %v233
    %v362 = vunpack.c.l.bf16 %v234
    %v363 = vunpack.c.l.bf16 %v235
    %v364 = vunpack.c.l.bf16 %v236
    %v365 = vunpack.c.l.bf16 %v237
    %v366 = vunpack.c.l.bf16 %v238
    %v367 = vunpack.c.l.bf16 %v239
    %v368 = vunpack.c.l.bf16 %v240
    %v370 = vsel %vm39, %v110, 0
    %v373 = vsel %vm39, %v241, 0
    %v376 = vsel %vm39, %v242, 0
    %v379 = vsel %vm39, %v243, 0
    %v382 = vsel %vm39, %v244, 0
    %v385 = vsel %vm39, %v245, 0
    %v388 = vsel %vm39, %v246, 0
    %v391 = vsel %vm39, %v247, 0
    %v394 = vsel %vm39, %v248, 0
    %v397 = vsel %vm39, %v249, 0
    %v400 = vsel %vm39, %v250, 0
    %v403 = vsel %vm39, %v251, 0
    %v406 = vsel %vm39, %v252, 0
    %v409 = vsel %vm39, %v253, 0
    %v412 = vsel %vm39, %v254, 0
    %v415 = vsel %vm39, %v255, 0
    %v418 = vsel %vm39, %v256, 0
    %v421 = vsel %vm39, %v257, 0
    %v424 = vsel %vm39, %v258, 0
    %v427 = vsel %vm39, %v259, 0
    %v430 = vsel %vm39, %v260, 0
    %v433 = vsel %vm39, %v261, 0
    %v436 = vsel %vm39, %v262, 0
    %v439 = vsel %vm39, %v263, 0
    %v442 = vsel %vm39, %v264, 0
    %v445 = vsel %vm39, %v265, 0
    %v448 = vsel %vm39, %v266, 0
    %v451 = vsel %vm39, %v267, 0
    %v454 = vsel %vm39, %v268, 0
    %v457 = vsel %vm39, %v269, 0
    %v460 = vsel %vm39, %v270, 0
    %v463 = vsel %vm39, %v271, 0
    %v466 = vsel %vm39, %v272, 0
    %v469 = vsel %vm39, %v273, 0
    %v472 = vsel %vm39, %v274, 0
    %v475 = vsel %vm39, %v275, 0
    %v478 = vsel %vm39, %v276, 0
    %v481 = vsel %vm39, %v277, 0
    %v484 = vsel %vm39, %v278, 0
    %v487 = vsel %vm39, %v279, 0
    %v490 = vsel %vm39, %v280, 0
    %v493 = vsel %vm39, %v281, 0
    %v496 = vsel %vm39, %v282, 0
    %v499 = vsel %vm39, %v283, 0
    %v502 = vsel %vm39, %v284, 0
    %v505 = vsel %vm39, %v285, 0
    %v508 = vsel %vm39, %v286, 0
    %v511 = vsel %vm39, %v287, 0
    %v514 = vsel %vm39, %v288, 0
    %v517 = vsel %vm39, %v289, 0
    %v520 = vsel %vm39, %v290, 0
    %v523 = vsel %vm39, %v291, 0
    %v526 = vsel %vm39, %v292, 0
    %v529 = vsel %vm39, %v293, 0
    %v532 = vsel %vm39, %v294, 0
    %v535 = vsel %vm39, %v295, 0
    %v538 = vsel %vm39, %v296, 0
    %v541 = vsel %vm39, %v297, 0
    %v544 = vsel %vm39, %v298, 0
    %v547 = vsel %vm39, %v299, 0
    %v550 = vsel %vm39, %v300, 0
    %v553 = vsel %vm39, %v301, 0
    %v556 = vsel %vm39, %v302, 0
    %v559 = vsel %vm39, %v303, 0
    %v562 = vsel %vm39, %v304, 0
    %v565 = vsel %vm39, %v305, 0
    %v568 = vsel %vm39, %v306, 0
    %v571 = vsel %vm39, %v307, 0
    %v574 = vsel %vm39, %v308, 0
    %v577 = vsel %vm39, %v309, 0
    %v580 = vsel %vm39, %v310, 0
    %v583 = vsel %vm39, %v311, 0
    %v586 = vsel %vm39, %v312, 0
    %v589 = vsel %vm39, %v313, 0
    %v592 = vsel %vm39, %v314, 0
    %v595 = vsel %vm39, %v315, 0
    %v598 = vsel %vm39, %v316, 0
    %v601 = vsel %vm39, %v317, 0
    %v604 = vsel %vm39, %v318, 0
    %v607 = vsel %vm39, %v319, 0
    %v610 = vsel %vm39, %v320, 0
    %v613 = vsel %vm39, %v321, 0
    %v616 = vsel %vm39, %v322, 0
    %v619 = vsel %vm39, %v323, 0
    %v622 = vsel %vm39, %v324, 0
    %v625 = vsel %vm39, %v325, 0
    %v628 = vsel %vm39, %v326, 0
    %v631 = vsel %vm39, %v327, 0
    %v634 = vsel %vm39, %v328, 0
    %v637 = vsel %vm39, %v329, 0
    %v640 = vsel %vm39, %v330, 0
    %v643 = vsel %vm39, %v331, 0
    %v646 = vsel %vm39, %v332, 0
    %v649 = vsel %vm39, %v333, 0
    %v652 = vsel %vm39, %v334, 0
    %v655 = vsel %vm39, %v335, 0
    %v658 = vsel %vm39, %v336, 0
    %v661 = vsel %vm39, %v337, 0
    %v664 = vsel %vm39, %v338, 0
    %v667 = vsel %vm39, %v339, 0
    %v670 = vsel %vm39, %v340, 0
    %v673 = vsel %vm39, %v341, 0
    %v676 = vsel %vm39, %v342, 0
    %v679 = vsel %vm39, %v343, 0
    %v682 = vsel %vm39, %v344, 0
    %v685 = vsel %vm39, %v345, 0
    %v688 = vsel %vm39, %v346, 0
    %v691 = vsel %vm39, %v347, 0
    %v694 = vsel %vm39, %v348, 0
    %v697 = vsel %vm39, %v349, 0
    %v700 = vsel %vm39, %v350, 0
    %v703 = vsel %vm39, %v351, 0
    %v706 = vsel %vm39, %v352, 0
    %v709 = vsel %vm39, %v353, 0
    %v712 = vsel %vm39, %v354, 0
    %v715 = vsel %vm39, %v355, 0
    %v718 = vsel %vm39, %v356, 0
    %v721 = vsel %vm39, %v357, 0
    %v724 = vsel %vm39, %v358, 0
    %v727 = vsel %vm39, %v359, 0
    %v730 = vsel %vm39, %v360, 0
    %v733 = vsel %vm39, %v361, 0
    %v736 = vsel %vm39, %v362, 0
    %v739 = vsel %vm39, %v363, 0
    %v742 = vsel %vm39, %v364, 0
    %v745 = vsel %vm39, %v365, 0
    %v748 = vsel %vm39, %v366, 0
    %v751 = vsel %vm39, %v367, 0
    %v754 = vsel %vm39, %v368, 0
    %756 = vmatprep.subr.mxu0 0.0
    %757 = vmatpush1.xpose.msra.mxu0 %v418
    %758 = vmatprep.subr.mxu0 0.0
    %759 = vmatpush1.xpose.msra.mxu0 %v415
    %760 = vmatprep.subr.mxu0 0.0
    %761 = vmatpush1.xpose.msra.mxu0 %v412
    %762 = vmatprep.subr.mxu0 0.0
    %763 = vmatpush1.xpose.msra.mxu0 %v409
    %764 = vmatprep.subr.mxu0 0.0
    %765 = vmatpush1.xpose.msra.mxu0 %v406
    %766 = vmatprep.subr.mxu0 0.0
    %767 = vmatpush1.xpose.msra.mxu0 %v403
    %768 = vmatprep.subr.mxu0 0.0
    %769 = vmatpush1.xpose.msra.mxu0 %v400
    %770 = vmatprep.subr.mxu0 0.0
    %771 = vmatpush1.xpose.msra.mxu0 %v397
    %772 = vmatprep.subr.mxu0 0.0
    %773 = vmatpush1.xpose.msra.mxu0 %v394
    %774 = vmatprep.subr.mxu0 0.0
    %775 = vmatpush1.xpose.msra.mxu0 %v391
    %776 = vmatprep.subr.mxu0 0.0
    %777 = vmatpush1.xpose.msra.mxu0 %v388
    %778 = vmatprep.subr.mxu0 0.0
    %779 = vmatpush1.xpose.msra.mxu0 %v385
    %780 = vmatprep.subr.mxu0 0.0
    %781 = vmatpush1.xpose.msra.mxu0 %v382
    %782 = vmatprep.subr.mxu0 0.0
    %783 = vmatpush1.xpose.msra.mxu0 %v379
    %784 = vmatprep.subr.mxu0 0.0
    %785 = vmatpush1.xpose.msra.mxu0 %v376
    %786 = vmatprep.subr.mxu0 0.0
    %787 = vmatpush1.xpose.msra.mxu0 %v373
    %788 = vmatprep.subr.mxu0 0.0
    %789 = vmatpush2.xpose.msra.mxu0 %v466
    %790 = vmatprep.subr.mxu0 0.0
    %791 = vmatpush2.xpose.msra.mxu0 %v463
    %792 = vmatprep.subr.mxu0 0.0
    %793 = vmatpush2.xpose.msra.mxu0 %v460
    %794 = vmatprep.subr.mxu0 0.0
    %795 = vmatpush2.xpose.msra.mxu0 %v457
    %796 = vmatprep.subr.mxu0 0.0
    %797 = vmatpush2.xpose.msra.mxu0 %v454
    %798 = vmatprep.subr.mxu0 0.0
    %799 = vmatpush2.xpose.msra.mxu0 %v451
    %800 = vmatprep.subr.mxu0 0.0
    %801 = vmatpush2.xpose.msra.mxu0 %v448
    %802 = vmatprep.subr.mxu0 0.0
    %803 = vmatpush2.xpose.msra.mxu0 %v445
    %804 = vmatprep.subr.mxu0 0.0
    %805 = vmatpush2.xpose.msra.mxu0 %v442
    %806 = vmatprep.subr.mxu0 0.0
    %807 = vmatpush2.xpose.msra.mxu0 %v439
    %808 = vmatprep.subr.mxu0 0.0
    %809 = vmatpush2.xpose.msra.mxu0 %v436
    %810 = vmatprep.subr.mxu0 0.0
    %811 = vmatpush2.xpose.msra.mxu0 %v433
    %812 = vmatprep.subr.mxu0 0.0
    %813 = vmatpush2.xpose.msra.mxu0 %v430
    %814 = vmatprep.subr.mxu0 0.0
    %815 = vmatpush2.xpose.msra.mxu0 %v427
    %816 = vmatprep.subr.mxu0 0.0
    %817 = vmatpush2.xpose.msra.mxu0 %v424
    %818 = vmatprep.subr.mxu0 0.0
    %819 = vmatpush2.xpose.msra.mxu0 %v421
    %820 = vmatprep.mubr.f32.mxu0 0.0
    %821 = vmatmul.mubr.f32.gmra.mxu0 %v370
    %v822 = vpop.f32.mrf.mxu0
    %v823 = vadd.f32 0.0, %v822
    %v824 = vpop.f32.mrf.mxu0
    %v825 = vadd.f32 0.0, %v824
    %826 = vdwg.mxu0
    %827 = vmatprep.subr.mxu0 0.0
    %828 = vmatpush1.xpose.msra.mxu0 %v514
    %829 = vmatprep.subr.mxu0 0.0
    %830 = vmatpush1.xpose.msra.mxu0 %v511
    %831 = vmatprep.subr.mxu0 0.0
    %832 = vmatpush1.xpose.msra.mxu0 %v508
    %833 = vmatprep.subr.mxu0 0.0
    %834 = vmatpush1.xpose.msra.mxu0 %v505
    %835 = vmatprep.subr.mxu0 0.0
    %836 = vmatpush1.xpose.msra.mxu0 %v502
    %837 = vmatprep.subr.mxu0 0.0
    %838 = vmatpush1.xpose.msra.mxu0 %v499
    %839 = vmatprep.subr.mxu0 0.0
    %840 = vmatpush1.xpose.msra.mxu0 %v496
    %841 = vmatprep.subr.mxu0 0.0
    %842 = vmatpush1.xpose.msra.mxu0 %v493
    %843 = vmatprep.subr.mxu0 0.0
    %844 = vmatpush1.xpose.msra.mxu0 %v490
    %845 = vmatprep.subr.mxu0 0.0
    %846 = vmatpush1.xpose.msra.mxu0 %v487
    %847 = vmatprep.subr.mxu0 0.0
    %848 = vmatpush1.xpose.msra.mxu0 %v484
    %849 = vmatprep.subr.mxu0 0.0
    %850 = vmatpush1.xpose.msra.mxu0 %v481
    %851 = vmatprep.subr.mxu0 0.0
    %852 = vmatpush1.xpose.msra.mxu0 %v478
    %853 = vmatprep.subr.mxu0 0.0
    %854 = vmatpush1.xpose.msra.mxu0 %v475
    %855 = vmatprep.subr.mxu0 0.0
    %856 = vmatpush1.xpose.msra.mxu0 %v472
    %857 = vmatprep.subr.mxu0 0.0
    %858 = vmatpush1.xpose.msra.mxu0 %v469
    %859 = vmatprep.subr.mxu0 0.0
    %860 = vmatpush2.xpose.msra.mxu0 %v562
    %861 = vmatprep.subr.mxu0 0.0
    %862 = vmatpush2.xpose.msra.mxu0 %v559
    %863 = vmatprep.subr.mxu0 0.0
    %864 = vmatpush2.xpose.msra.mxu0 %v556
    %865 = vmatprep.subr.mxu0 0.0
    %866 = vmatpush2.xpose.msra.mxu0 %v553
    %867 = vmatprep.subr.mxu0 0.0
    %868 = vmatpush2.xpose.msra.mxu0 %v550
    %869 = vmatprep.subr.mxu0 0.0
    %870 = vmatpush2.xpose.msra.mxu0 %v547
    %871 = vmatprep.subr.mxu0 0.0
    %872 = vmatpush2.xpose.msra.mxu0 %v544
    %873 = vmatprep.subr.mxu0 0.0
    %874 = vmatpush2.xpose.msra.mxu0 %v541
    %875 = vmatprep.subr.mxu0 0.0
    %876 = vmatpush2.xpose.msra.mxu0 %v538
    %877 = vmatprep.subr.mxu0 0.0
    %878 = vmatpush2.xpose.msra.mxu0 %v535
    %879 = vmatprep.subr.mxu0 0.0
    %880 = vmatpush2.xpose.msra.mxu0 %v532
    %881 = vmatprep.subr.mxu0 0.0
    %882 = vmatpush2.xpose.msra.mxu0 %v529
    %883 = vmatprep.subr.mxu0 0.0
    %884 = vmatpush2.xpose.msra.mxu0 %v526
    %885 = vmatprep.subr.mxu0 0.0
    %886 = vmatpush2.xpose.msra.mxu0 %v523
    %887 = vmatprep.subr.mxu0 0.0
    %888 = vmatpush2.xpose.msra.mxu0 %v520
    %889 = vmatprep.subr.mxu0 0.0
    %890 = vmatpush2.xpose.msra.mxu0 %v517
    %891 = vmatprep.mubr.f32.mxu0 0.0
    %892 = vmatmul.mubr.f32.gmra.mxu0 %v370
    %v893 = vpop.f32.mrf.mxu0
    %v894 = vadd.f32 0.0, %v893
    %v895 = vpop.f32.mrf.mxu0
    %v896 = vadd.f32 0.0, %v895
    %897 = vdwg.mxu0
    %898 = vmatprep.subr.mxu0 0.0
    %899 = vmatpush1.xpose.msra.mxu0 %v610
    %900 = vmatprep.subr.mxu0 0.0
    %901 = vmatpush1.xpose.msra.mxu0 %v607
    %902 = vmatprep.subr.mxu0 0.0
    %903 = vmatpush1.xpose.msra.mxu0 %v604
    %904 = vmatprep.subr.mxu0 0.0
    %905 = vmatpush1.xpose.msra.mxu0 %v601
    %906 = vmatprep.subr.mxu0 0.0
    %907 = vmatpush1.xpose.msra.mxu0 %v598
    %908 = vmatprep.subr.mxu0 0.0
    %909 = vmatpush1.xpose.msra.mxu0 %v595
    %910 = vmatprep.subr.mxu0 0.0
    %911 = vmatpush1.xpose.msra.mxu0 %v592
    %912 = vmatprep.subr.mxu0 0.0
    %913 = vmatpush1.xpose.msra.mxu0 %v589
    %914 = vmatprep.subr.mxu0 0.0
    %915 = vmatpush1.xpose.msra.mxu0 %v586
    %916 = vmatprep.subr.mxu0 0.0
    %917 = vmatpush1.xpose.msra.mxu0 %v583
    %918 = vmatprep.subr.mxu0 0.0
    %919 = vmatpush1.xpose.msra.mxu0 %v580
    %920 = vmatprep.subr.mxu0 0.0
    %921 = vmatpush1.xpose.msra.mxu0 %v577
    %922 = vmatprep.subr.mxu0 0.0
    %923 = vmatpush1.xpose.msra.mxu0 %v574
    %924 = vmatprep.subr.mxu0 0.0
    %925 = vmatpush1.xpose.msra.mxu0 %v571
    %926 = vmatprep.subr.mxu0 0.0
    %927 = vmatpush1.xpose.msra.mxu0 %v568
    %928 = vmatprep.subr.mxu0 0.0
    %929 = vmatpush1.xpose.msra.mxu0 %v565
    %930 = vmatprep.subr.mxu0 0.0
    %931 = vmatpush2.xpose.msra.mxu0 %v658
    %932 = vmatprep.subr.mxu0 0.0
    %933 = vmatpush2.xpose.msra.mxu0 %v655
    %934 = vmatprep.subr.mxu0 0.0
    %935 = vmatpush2.xpose.msra.mxu0 %v652
    %936 = vmatprep.subr.mxu0 0.0
    %937 = vmatpush2.xpose.msra.mxu0 %v649
    %938 = vmatprep.subr.mxu0 0.0
    %939 = vmatpush2.xpose.msra.mxu0 %v646
    %940 = vmatprep.subr.mxu0 0.0
    %941 = vmatpush2.xpose.msra.mxu0 %v643
    %942 = vmatprep.subr.mxu0 0.0
    %943 = vmatpush2.xpose.msra.mxu0 %v640
    %944 = vmatprep.subr.mxu0 0.0
    %945 = vmatpush2.xpose.msra.mxu0 %v637
    %946 = vmatprep.subr.mxu0 0.0
    %947 = vmatpush2.xpose.msra.mxu0 %v634
    %948 = vmatprep.subr.mxu0 0.0
    %949 = vmatpush2.xpose.msra.mxu0 %v631
    %950 = vmatprep.subr.mxu0 0.0
    %951 = vmatpush2.xpose.msra.mxu0 %v628
    %952 = vmatprep.subr.mxu0 0.0
    %953 = vmatpush2.xpose.msra.mxu0 %v625
    %954 = vmatprep.subr.mxu0 0.0
    %955 = vmatpush2.xpose.msra.mxu0 %v622
    %956 = vmatprep.subr.mxu0 0.0
    %957 = vmatpush2.xpose.msra.mxu0 %v619
    %958 = vmatprep.subr.mxu0 0.0
    %959 = vmatpush2.xpose.msra.mxu0 %v616
    %960 = vmatprep.subr.mxu0 0.0
    %961 = vmatpush2.xpose.msra.mxu0 %v613
    %962 = vmatprep.mubr.f32.mxu0 0.0
    %963 = vmatmul.mubr.f32.gmra.mxu0 %v370
    %v964 = vpop.f32.mrf.mxu0
    %v965 = vadd.f32 0.0, %v964
    %v966 = vpop.f32.mrf.mxu0
    %v967 = vadd.f32 0.0, %v966
    %968 = vdwg.mxu0
    %969 = vmatprep.subr.mxu0 0.0
    %970 = vmatpush1.xpose.msra.mxu0 %v706
    %971 = vmatprep.subr.mxu0 0.0
    %972 = vmatpush1.xpose.msra.mxu0 %v703
    %973 = vmatprep.subr.mxu0 0.0
    %974 = vmatpush1.xpose.msra.mxu0 %v700
    %975 = vmatprep.subr.mxu0 0.0
    %976 = vmatpush1.xpose.msra.mxu0 %v697
    %977 = vmatprep.subr.mxu0 0.0
    %978 = vmatpush1.xpose.msra.mxu0 %v694
    %979 = vmatprep.subr.mxu0 0.0
    %980 = vmatpush1.xpose.msra.mxu0 %v691
    %981 = vmatprep.subr.mxu0 0.0
    %982 = vmatpush1.xpose.msra.mxu0 %v688
    %983 = vmatprep.subr.mxu0 0.0
    %984 = vmatpush1.xpose.msra.mxu0 %v685
    %985 = vmatprep.subr.mxu0 0.0
    %986 = vmatpush1.xpose.msra.mxu0 %v682
    %987 = vmatprep.subr.mxu0 0.0
    %988 = vmatpush1.xpose.msra.mxu0 %v679
    %989 = vmatprep.subr.mxu0 0.0
    %990 = vmatpush1.xpose.msra.mxu0 %v676
    %991 = vmatprep.subr.mxu0 0.0
    %992 = vmatpush1.xpose.msra.mxu0 %v673
    %993 = vmatprep.subr.mxu0 0.0
    %994 = vmatpush1.xpose.msra.mxu0 %v670
    %995 = vmatprep.subr.mxu0 0.0
    %996 = vmatpush1.xpose.msra.mxu0 %v667
    %997 = vmatprep.subr.mxu0 0.0
    %998 = vmatpush1.xpose.msra.mxu0 %v664
    %999 = vmatprep.subr.mxu0 0.0
    %1000 = vmatpush1.xpose.msra.mxu0 %v661
    %1001 = vmatprep.subr.mxu0 0.0
    %1002 = vmatpush2.xpose.msra.mxu0 %v754
    %1003 = vmatprep.subr.mxu0 0.0
    %1004 = vmatpush2.xpose.msra.mxu0 %v751
    %1005 = vmatprep.subr.mxu0 0.0
    %1006 = vmatpush2.xpose.msra.mxu0 %v748
    %1007 = vmatprep.subr.mxu0 0.0
    %1008 = vmatpush2.xpose.msra.mxu0 %v745
    %1009 = vmatprep.subr.mxu0 0.0
    %1010 = vmatpush2.xpose.msra.mxu0 %v742
    %1011 = vmatprep.subr.mxu0 0.0
    %1012 = vmatpush2.xpose.msra.mxu0 %v739
    %1013 = vmatprep.subr.mxu0 0.0
    %1014 = vmatpush2.xpose.msra.mxu0 %v736
    %1015 = vmatprep.subr.mxu0 0.0
    %1016 = vmatpush2.xpose.msra.mxu0 %v733
    %1017 = vmatprep.subr.mxu0 0.0
    %1018 = vmatpush2.xpose.msra.mxu0 %v730
    %1019 = vmatprep.subr.mxu0 0.0
    %1020 = vmatpush2.xpose.msra.mxu0 %v727
    %1021 = vmatprep.subr.mxu0 0.0
    %1022 = vmatpush2.xpose.msra.mxu0 %v724
    %1023 = vmatprep.subr.mxu0 0.0
    %1024 = vmatpush2.xpose.msra.mxu0 %v721
    %1025 = vmatprep.subr.mxu0 0.0
    %1026 = vmatpush2.xpose.msra.mxu0 %v718
    %1027 = vmatprep.subr.mxu0 0.0
    %1028 = vmatpush2.xpose.msra.mxu0 %v715
    %1029 = vmatprep.subr.mxu0 0.0
    %1030 = vmatpush2.xpose.msra.mxu0 %v712
    %1031 = vmatprep.subr.mxu0 0.0
    %1032 = vmatpush2.xpose.msra.mxu0 %v709
    %1033 = vmatprep.mubr.f32.mxu0 0.0
    %1034 = vmatmul.mubr.f32.gmra.mxu0 %v370
    %v1035 = vpop.f32.mrf.mxu0
    %v1036 = vadd.f32 0.0, %v1035
    %v1037 = vpop.f32.mrf.mxu0
    %v1038 = vadd.f32 0.0, %v1037
    %1039 = vdwg.mxu0
    %v1040 = vld [vmem:[%s2] sm:$0x1]
    %v1042 = vlaneseq
    %v1043 = vshrl.u32 %v1042, 7
    %v1044 = vsub.s32 0, %v1043
    %v1045 = vrot.slane %v1040, %v1044
    %v1047 = vmul.f32 %v1045, %v110
    %vm1048 = vcmask 254976
    %v1049 = vsel %vm1048, %v1047, 0.0
    %1050 = vadd.xlane.f32.xlu0 %v1049
    %v1051 = vpop.xlane.xlu0 %1050
    %v1052 = vld [vmem:[%s0] sm:$0xff]
    %v1053 = vld [vmem:[%s0 + $0x8] sm:$0xff]
    %v1054 = vld [vmem:[%s0 + $0x10] sm:$0xff]
    %v1055 = vld [vmem:[%s0 + $0x18] sm:$0xff]
    %v1056 = vunpack.c.l.bf16 %v1052
    %v1057 = vunpack.c.h.bf16 %v1052
    %v1058 = vunpack.c.l.bf16 %v1053
    %v1059 = vunpack.c.h.bf16 %v1053
    %v1060 = vunpack.c.l.bf16 %v1054
    %v1061 = vunpack.c.h.bf16 %v1054
    %v1062 = vunpack.c.l.bf16 %v1055
    %v1063 = vunpack.c.h.bf16 %v1055
    %v1072 = vcombine.low %v823, %v825
    %v1073 = vcombine.low %v894, %v896
    %v1074 = vcombine.low %v965, %v967
    %v1075 = vcombine.low %v1036, %v1038
    %v1077 = vunpack.c.l.s4 1966171168
    %v1078 = vunpack.c.0.s8 %v1077
    %v1079 = vlaneseq
    %v1080 = vshrl.u32 %v1079, 7
    %v1081 = vsub.s32 %v1078, %v1080
    %v1082 = vrot.slane %v1072, %v1081
    %v1084 = vunpack.c.l.s4 1966171168
    %v1085 = vunpack.c.0.s8 %v1084
    %v1086 = vlaneseq
    %v1087 = vshrl.u32 %v1086, 7
    %v1088 = vsub.s32 %v1085, %v1087
    %v1089 = vrot.slane %v1073, %v1088
    %v1091 = vunpack.c.l.s4 1966171168
    %v1092 = vunpack.c.0.s8 %v1091
    %v1093 = vlaneseq
    %v1094 = vshrl.u32 %v1093, 7
    %v1095 = vsub.s32 %v1092, %v1094
    %v1096 = vrot.slane %v1074, %v1095
    %v1098 = vunpack.c.l.s4 1966171168
    %v1099 = vunpack.c.0.s8 %v1098
    %v1100 = vlaneseq
    %v1101 = vshrl.u32 %v1100, 7
    %v1102 = vsub.s32 %v1099, %v1101
    %v1103 = vrot.slane %v1075, %v1102
    %v1104 = vcombine.low %v1082, %v1089
    %v1105 = vcombine.high %v1082, %v1089
    %v1106 = vcombine.low %v1096, %v1103
    %v1107 = vcombine.high %v1096, %v1103
    %v1109 = vunpack.c.l.s4 1966171168
    %v1110 = vunpack.c.0.s8 %v1109
    %v1111 = vlaneseq
    %v1112 = vshrl.u32 %v1111, 7
    %v1113 = vsub.s32 %v1110, %v1112
    %v1114 = vrot.slane %v1104, %v1113
    %v1116 = vunpack.c.l.s4 1966171168
    %v1117 = vunpack.c.0.s8 %v1116
    %v1118 = vlaneseq
    %v1119 = vshrl.u32 %v1118, 7
    %v1120 = vsub.s32 %v1117, %v1119
    %v1121 = vrot.slane %v1105, %v1120
    %v1123 = vunpack.c.l.s4 1966171168
    %v1124 = vunpack.c.0.s8 %v1123
    %v1125 = vlaneseq
    %v1126 = vshrl.u32 %v1125, 7
    %v1127 = vsub.s32 %v1124, %v1126
    %v1128 = vrot.slane %v1106, %v1127
    %v1130 = vunpack.c.l.s4 1966171168
    %v1131 = vunpack.c.0.s8 %v1130
    %v1132 = vlaneseq
    %v1133 = vshrl.u32 %v1132, 7
    %v1134 = vsub.s32 %v1131, %v1133
    %v1135 = vrot.slane %v1107, %v1134
    %v1136 = vcombine.low %v1114, %v1128
    %v1137 = vcombine.low %v1121, %v1135
    %v1138 = vlaneseq
    %v1139 = vshrl.u32 %v1138, 7
    %v1140 = vsub.s32 0, %v1139
    %v1141 = vrot.slane %v1136, %v1140
    %v1142 = vlaneseq
    %v1143 = vshrl.u32 %v1142, 7
    %v1144 = vsub.s32 1, %v1143
    %v1145 = vrot.slane %v1136, %v1144
    %v1146 = vlaneseq
    %v1147 = vshrl.u32 %v1146, 7
    %v1148 = vsub.s32 2, %v1147
    %v1149 = vrot.slane %v1136, %v1148
    %v1150 = vlaneseq
    %v1151 = vshrl.u32 %v1150, 7
    %v1152 = vsub.s32 3, %v1151
    %v1153 = vrot.slane %v1136, %v1152
    %v1154 = vlaneseq
    %v1155 = vshrl.u32 %v1154, 7
    %v1156 = vsub.s32 4, %v1155
    %v1157 = vrot.slane %v1136, %v1156
    %v1158 = vlaneseq
    %v1159 = vshrl.u32 %v1158, 7
    %v1160 = vsub.s32 5, %v1159
    %v1161 = vrot.slane %v1136, %v1160
    %v1162 = vlaneseq
    %v1163 = vshrl.u32 %v1162, 7
    %v1164 = vsub.s32 6, %v1163
    %v1165 = vrot.slane %v1136, %v1164
    %v1166 = vlaneseq
    %v1167 = vshrl.u32 %v1166, 7
    %v1168 = vsub.s32 7, %v1167
    %v1169 = vrot.slane %v1136, %v1168
    %v1170 = vlaneseq
    %v1171 = vshrl.u32 %v1170, 7
    %v1172 = vsub.s32 0, %v1171
    %v1173 = vrot.slane %v1137, %v1172
    %v1174 = vlaneseq
    %v1175 = vshrl.u32 %v1174, 7
    %v1176 = vsub.s32 1, %v1175
    %v1177 = vrot.slane %v1137, %v1176
    %v1178 = vlaneseq
    %v1179 = vshrl.u32 %v1178, 7
    %v1180 = vsub.s32 2, %v1179
    %v1181 = vrot.slane %v1137, %v1180
    %v1182 = vlaneseq
    %v1183 = vshrl.u32 %v1182, 7
    %v1184 = vsub.s32 3, %v1183
    %v1185 = vrot.slane %v1137, %v1184
    %v1186 = vlaneseq
    %v1187 = vshrl.u32 %v1186, 7
    %v1188 = vsub.s32 4, %v1187
    %v1189 = vrot.slane %v1137, %v1188
    %v1190 = vlaneseq
    %v1191 = vshrl.u32 %v1190, 7
    %v1192 = vsub.s32 5, %v1191
    %v1193 = vrot.slane %v1137, %v1192
    %v1194 = vlaneseq
    %v1195 = vshrl.u32 %v1194, 7
    %v1196 = vsub.s32 6, %v1195
    %v1197 = vrot.slane %v1137, %v1196
    %v1198 = vlaneseq
    %v1199 = vshrl.u32 %v1198, 7
    %v1200 = vsub.s32 7, %v1199
    %v1201 = vrot.slane %v1137, %v1200
    %v1202 = vcombine.low %v1141, %v1145
    %v1203 = vcombine.low %v1149, %v1153
    %v1204 = vcombine.low %v1157, %v1161
    %v1205 = vcombine.low %v1165, %v1169
    %v1206 = vcombine.low %v1173, %v1177
    %v1207 = vcombine.low %v1181, %v1185
    %v1208 = vcombine.low %v1189, %v1193
    %v1209 = vcombine.low %v1197, %v1201
    %v1218 = vmul.f32 %v1056, %v1202
    %v1219 = vmul.f32 %v1057, %v1203
    %v1220 = vmul.f32 %v1058, %v1204
    %v1221 = vmul.f32 %v1059, %v1205
    %v1222 = vmul.f32 %v1060, %v1206
    %v1223 = vmul.f32 %v1061, %v1207
    %v1224 = vmul.f32 %v1062, %v1208
    %v1225 = vmul.f32 %v1063, %v1209
    %v1234 = vcombine.high %v1218, %v1218
    %v1235 = vcombine.high %v1219, %v1219
    %v1236 = vcombine.high %v1220, %v1220
    %v1237 = vcombine.high %v1221, %v1221
    %v1238 = vcombine.high %v1222, %v1222
    %v1239 = vcombine.high %v1223, %v1223
    %v1240 = vcombine.high %v1224, %v1224
    %v1241 = vcombine.high %v1225, %v1225
    %vm1250 = vcmask 1043456
    %v1251 = vsel %vm1250, %v1218, 0.0
    %v1252 = vsel %vm1250, %v1234, 0.0
    %v1253 = vadd.f32 %v1251, %v1252
    %v1254 = vsel %vm1250, %v1219, 0.0
    %v1255 = vadd.f32 %v1253, %v1254
    %v1256 = vsel %vm1250, %v1235, 0.0
    %v1257 = vadd.f32 %v1255, %v1256
    %v1258 = vsel %vm1250, %v1220, 0.0
    %v1259 = vadd.f32 %v1257, %v1258
    %v1260 = vsel %vm1250, %v1236, 0.0
    %v1261 = vadd.f32 %v1259, %v1260
    %v1262 = vsel %vm1250, %v1221, 0.0
    %v1263 = vadd.f32 %v1261, %v1262
    %v1264 = vsel %vm1250, %v1237, 0.0
    %v1265 = vadd.f32 %v1263, %v1264
    %1266 = vadd.xlane.f32.xlu0 %v1265
    %v1267 = vpop.xlane.xlu0 %1266
    %v1268 = vsel %vm1250, %v1222, 0.0
    %v1269 = vsel %vm1250, %v1238, 0.0
    %v1270 = vadd.f32 %v1268, %v1269
    %v1271 = vsel %vm1250, %v1223, 0.0
    %v1272 = vadd.f32 %v1270, %v1271
    %v1273 = vsel %vm1250, %v1239, 0.0
    %v1274 = vadd.f32 %v1272, %v1273
    %v1275 = vsel %vm1250, %v1224, 0.0
    %v1276 = vadd.f32 %v1274, %v1275
    %v1277 = vsel %vm1250, %v1240, 0.0
    %v1278 = vadd.f32 %v1276, %v1277
    %v1279 = vsel %vm1250, %v1225, 0.0
    %v1280 = vadd.f32 %v1278, %v1279
    %v1281 = vsel %vm1250, %v1241, 0.0
    %v1282 = vadd.f32 %v1280, %v1281
    %1283 = vadd.xlane.f32.xlu0 %v1282
    %v1284 = vpop.xlane.xlu0 %1283
    %v1286 = vlaneseq
    %v1287 = vshrl.u32 %v1286, 7
    %v1288 = vsub.s32 0, %v1287
    %v1289 = vrot.slane %v1051, %v1288
    %v1290 = vlaneseq
    %v1291 = vshrl.u32 %v1290, 7
    %v1292 = vsub.s32 1, %v1291
    %v1293 = vrot.slane %v1051, %v1292
    %v1296 = vadd.f32 %v1267, %v1289
    %v1297 = vadd.f32 %v1284, %v1293
    %1300 = vset.pattern.permute.xlu0 0
    %1301 = vperm.xlu0 %1300, %v1296
    %v1302 = vpop.permute.xlu0 %1301
    %1303 = vset.pattern.permute.xlu0 0
    %1304 = vperm.xlu0 %1303, %v1297
    %v1305 = vpop.permute.xlu0 %1304
    %v1306 = vlaneseq
    %v1307 = vand.u32 %v1306, 127
    %v1308 = vlaneseq
    %v1309 = vshrl.u32 %v1308, 7
    %v1310 = vsub.s32 %v1307, %v1309
    %v1311 = vrot.slane %v1302, %v1310
    %v1312 = vlaneseq
    %v1313 = vshrl.u32 %v1312, 7
    %v1314 = vsub.s32 %v1307, %v1313
    %v1315 = vrot.slane %v1305, %v1314
    %vm1316 = vcmask 1041409
    %v1317 = vsel %vm1316, %v1315, %v1311
    %vm1319 = vcmask 25600
    %v1320 = vsel %vm1319, %v1317, -inf
    %1321 = vmax.xlane.f32.xlu0 %v1320
    %v1322 = vpop.xlane.xlu0 %1321
    %v1324 = vlaneseq
    %v1325 = vshrl.u32 %v1324, 7
    %v1326 = vsub.s32 0, %v1325
    %v1327 = vrot.slane %v1322, %v1326
    %v1328 = vlaneseq
    %v1329 = vshrl.u32 %v1328, 7
    %v1330 = vsub.s32 1, %v1329
    %v1331 = vrot.slane %v1322, %v1330
    %v1334 = vsub.f32 %v1296, %v1327
    %v1335 = vsub.f32 %v1297, %v1331
    %v1336 = vmul.f32 %v1334, 1.442695
    %v1337 = vpow.pop %v1336
    %v1338 = vmul.f32 %v1335, 1.442695
    %v1339 = vpow.pop %v1338
    %1342 = vset.pattern.permute.xlu0 0
    %1343 = vperm.xlu0 %1342, %v1337
    %v1344 = vpop.permute.xlu0 %1343
    %1345 = vset.pattern.permute.xlu0 0
    %1346 = vperm.xlu0 %1345, %v1339
    %v1347 = vpop.permute.xlu0 %1346
    %v1348 = vlaneseq
    %v1349 = vshrl.u32 %v1348, 7
    %v1350 = vsub.s32 %v1307, %v1349
    %v1351 = vrot.slane %v1344, %v1350
    %v1352 = vlaneseq
    %v1353 = vshrl.u32 %v1352, 7
    %v1354 = vsub.s32 %v1307, %v1353
    %v1355 = vrot.slane %v1347, %v1354
    %v1356 = vsel %vm1316, %v1355, %v1351
    %v1358 = vsel %vm1319, %v1356, 0.0
    %1359 = vadd.xlane.f32.xlu0 %v1358
    %v1360 = vpop.xlane.xlu0 %1359
    %v1361 = vlog2.pop %v1360
    %v1362 = vmul.f32 %v1361, 0.6931472
    %v1364 = vlaneseq
    %v1365 = vshrl.u32 %v1364, 7
    %v1366 = vsub.s32 0, %v1365
    %v1367 = vrot.slane %v1362, %v1366
    %v1368 = vlaneseq
    %v1369 = vshrl.u32 %v1368, 7
    %v1370 = vsub.s32 1, %v1369
    %v1371 = vrot.slane %v1362, %v1370
    %v1374 = vsub.f32 %v1334, %v1367
    %v1375 = vsub.f32 %v1335, %v1371
    %1378 = vset.pattern.permute.xlu0 0
    %1379 = vperm.xlu0 %1378, %v1374
    %v1380 = vpop.permute.xlu0 %1379
    %1381 = vset.pattern.permute.xlu0 0
    %1382 = vperm.xlu0 %1381, %v1375
    %v1383 = vpop.permute.xlu0 %1382
    %v1384 = vlaneseq
    %v1385 = vshrl.u32 %v1384, 7
    %v1386 = vsub.s32 %v1307, %v1385
    %v1387 = vrot.slane %v1380, %v1386
    %v1388 = vlaneseq
    %v1389 = vshrl.u32 %v1388, 7
    %v1390 = vsub.s32 %v1307, %v1389
    %v1391 = vrot.slane %v1383, %v1390
    %v1392 = vsel %vm1316, %v1391, %v1387
    %1394 = vst.msk [vmem:[#allocation2] sm:$0x3] %vm1319, %v1392
    %v1395 = vrcp.pop %v1360
    %v1397 = vlaneseq
    %v1398 = vshrl.u32 %v1397, 7
    %v1399 = vsub.s32 0, %v1398
    %v1400 = vrot.slane %v1395, %v1399
    %v1401 = vlaneseq
    %v1402 = vshrl.u32 %v1401, 7
    %v1403 = vsub.s32 1, %v1402
    %v1404 = vrot.slane %v1395, %v1403
    %v1407 = vmul.f32 %v1337, %v1400
    %v1408 = vmul.f32 %v1339, %v1404
    %v1409 = vmul.f32 %v1407, 100.0
    %v1410 = vmul.f32 %v1408, 100.0
    %v1411 = vround.ne.pseudo %v1409
    %v1412 = vround.ne.pseudo %v1410
    %v1413 = vrcp.pop 100.0
    %v1414 = vmul.f32 %v1411, %v1413
    %v1415 = vmul.f32 %v1412, %v1413
    %1418 = vset.pattern.permute.xlu0 0
    %1419 = vperm.xlu0 %1418, %v1414
    %v1420 = vpop.permute.xlu0 %1419
    %1421 = vset.pattern.permute.xlu0 0
    %1422 = vperm.xlu0 %1421, %v1415
    %v1423 = vpop.permute.xlu0 %1422
    %v1424 = vlaneseq
    %v1425 = vshrl.u32 %v1424, 7
    %v1426 = vsub.s32 %v1307, %v1425
    %v1427 = vrot.slane %v1420, %v1426
    %v1428 = vlaneseq
    %v1429 = vshrl.u32 %v1428, 7
    %v1430 = vsub.s32 %v1307, %v1429
    %v1431 = vrot.slane %v1423, %v1430
    %v1432 = vsel %vm1316, %v1431, %v1427
    %1434 = vst.msk [vmem:[#allocation4] sm:$0x3] %vm1319, %v1432
    // Predicated region
    $region26: #{tpu_custom_call.1} parent=1 // pred_check
      _
    $region27: #{tpu_custom_call.1} parent=1 // pred_check_branch
      %1436 = sbr.rel (0) target = $region29
    $region28: #{tpu_custom_call.1} parent=1 // pred_region
      %s1438 = ssub.s32 32, 32
      %1439 = vsyncadd [#allocation3], %s1438
      %s1441 = sshll.u32 [#allocation2], 4
      %s1442 = int_to_ptr.vmem [resolvable:$true] %s1441
      %1444 = dma.vmem_to_hbm [thread:$0]  %s1442, 32, %s6, [#allocation3]
    $region29: #{tpu_custom_call.1} parent=1 // pred_fallthru
      _
    // Predicated region
    $region30: #{tpu_custom_call.1} parent=1 // pred_check
      _
    $region31: #{tpu_custom_call.1} parent=1 // pred_check_branch
      %1446 = sbr.rel (0) target = $region33
    $region32: #{tpu_custom_call.1} parent=1 // pred_region
      %s1448 = ssub.s32 32, 32
      %1449 = vsyncadd [#allocation5], %s1448
      %s1451 = sshll.u32 [#allocation4], 4
      %s1452 = int_to_ptr.vmem [resolvable:$true] %s1451
      %1454 = dma.vmem_to_hbm [thread:$0]  %s1452, 32, %s7, [#allocation5]
    $region33: #{tpu_custom_call.1} parent=1 // pred_fallthru
      _
    // Predicated region
    $region34: #{tpu_custom_call.1} parent=1 // pred_check
      _
    $region35: #{tpu_custom_call.1} parent=1 // pred_check_branch
      %1456 = sbr.rel (0) target = $region37
    $region36: #{tpu_custom_call.1} parent=1 // pred_region
      %1457 = dma.done [#allocation3], 32
    $region37: #{tpu_custom_call.1} parent=1 // pred_fallthru
      _
    // Predicated region
    $region38: #{tpu_custom_call.1} parent=1 // pred_check
      _
    $region39: #{tpu_custom_call.1} parent=1 // pred_check_branch
      %1459 = sbr.rel (0) target = $region41
    $region40: #{tpu_custom_call.1} parent=1 // pred_region
      %1460 = dma.done [#allocation5], 32
    $region41: #{tpu_custom_call.1} parent=1 // pred_fallthru
      _
    %1461 = vsyncpa [#allocation3], 1
    %1462 = vsyncpa [#allocation5], 1

</llo_original>
